<compile_context>
chip_gen: v6e
topology: v6e:2x2x1
jax: 0.10.0
libtpu: 0.0.40
codegen_flags: <defaults>
</compile_context>

<pallas_src>
import functools

import jax
import jax.numpy as jnp
from jax import lax
from jax.experimental import pallas as pl
from jax.experimental.pallas import tpu as pltpu


def _patch_embed_kernel(x_ref, w_ref, b_ref, o_ref, *, precision):
    # x_ref: (1, K, TS) im2col columns of one image tile
    # w_ref: (C_out, K) flattened conv weight (grid-invariant)
    # b_ref: (C_out, 1) f32 bias                (grid-invariant)
    # o_ref: (1, C_out, TS) -- NCHW orientation: lanes = spatial positions
    acc = jnp.dot(w_ref[...], x_ref[0],
                  preferred_element_type=jnp.float32,
                  precision=precision)
    o_ref[0] = (acc + b_ref[...]).astype(o_ref.dtype)


def patch_embeddings(x, weight, bias, patch_size, compute_dtype=None,
                     conservative=False):
    """Patch-embedding conv (kernel == stride == P) as a per-image GEMM.

    x: (B, C_in, H, W) NCHW; weight: (C_out, C_in, P, P); bias: (C_out,).
    Returns (B, C_out, H//P, W//P), matching torch.nn.Conv2d(..., stride=P).

    `conservative=True` drops the pl.Buffered(1) / precision attributes (pure
    fallback for older jax builds; numerics and layout are unchanged).
    """
    B, C, H, W = x.shape
    P = patch_size
    C_out = weight.shape[0]
    Hp, Wp = H // P, W // P
    S = Hp * Wp
    K = C * P * P

    # torch Conv2d(kernel=P, stride=P, VALID) silently drops trailing rows/cols.
    if H != Hp * P or W != Wp * P:
        x = x[:, :, :Hp * P, :Wp * P]

    gemm_dtype = jnp.dtype(compute_dtype) if compute_dtype is not None else x.dtype
    out_dtype = x.dtype

    # --- im2col: the single materialized relayout of x (see module header) ---
    # (B,C,Hp,P,Wp,P) -> (B, C,ph,pw, Hp,Wp) -> (B, K, S); K ordered (ci,ph,pw).
    xcol = jnp.transpose(x.reshape(B, C, Hp, P, Wp, P),
                         (0, 1, 3, 5, 2, 4)).reshape(B, K, S)
    xcol = xcol.astype(gemm_dtype)                 # cast fuses into the transpose
    w2 = weight.reshape(C_out, K).astype(gemm_dtype)   # already (ci,ph,pw) ordered
    b2 = bias.reshape(C_out, 1).astype(jnp.float32)    # epilogue stays f32

    # --- spatial tile from a VMEM budget; only tile when (8,128)-legal -------
    itm = jnp.dtype(gemm_dtype).itemsize
    oitm = jnp.dtype(out_dtype).itemsize

    def _tile_bytes(ts):
        # double-buffered x block + single weight/bias copy + double-buffered out
        return (2 * K * ts) * itm + (K * C_out + C_out) * itm + 2 * C_out * ts * oitm

    budget = 12 * 1024 * 1024        # safe under v5e's 16 MiB default scope
    TS = S
    if S % 128 == 0:
        while (TS > 128 and TS % 2 == 0 and (TS // 2) % 128 == 0
               and _tile_bytes(TS) > budget):
            TS //= 2

    grid = (B, S // TS)              # both axes independent -> both TCs get work

    precision = None
    if not conservative and gemm_dtype == jnp.float32:
        precision = lax.Precision.HIGHEST

    inv_kwargs = {} if conservative else {"pipeline_mode": pl.Buffered(1)}

    est_vmem = _tile_bytes(TS)
    cp_kwargs = dict(dimension_semantics=("parallel", "parallel"))
    if est_vmem > 30 * 1024 * 1024:  # only raise above the default scoped limit
        cp_kwargs["vmem_limit_bytes"] = int(min(1.5 * est_vmem, 48 * 1024 * 1024))

    cost = pl.CostEstimate(
        flops=2 * B * C_out * K * S,
        transcendentals=0,
        bytes_accessed=(xcol.size * itm + w2.size * itm + b2.size * 4
                        + B * C_out * S * oitm),
    )

    out = pl.pallas_call(
        functools.partial(_patch_embed_kernel, precision=precision),
        out_shape=jax.ShapeDtypeStruct((B, C_out, S), out_dtype),
        grid=grid,
        in_specs=[
            pl.BlockSpec((1, K, TS), lambda b, s: (b, 0, s)),              # x cols
            pl.BlockSpec((C_out, K), lambda b, s: (0, 0), **inv_kwargs),   # weight
            pl.BlockSpec((C_out, 1), lambda b, s: (0, 0), **inv_kwargs),   # bias
        ],
        out_specs=pl.BlockSpec((1, C_out, TS), lambda b, s: (b, 0, s)),
        compiler_params=pltpu.CompilerParams(**cp_kwargs),
        cost_estimate=cost,
    )(xcol, w2, b2)

    # Metadata-only reshape (contiguous split of the last dim) -> NCHW output.
    return out.reshape(B, C_out, Hp, Wp)


if __name__ == "__main__":
    # Small shapes consistent with the module: B=2, C=4, H=W=16, patch=4.
    B, C, H, W, P = 2, 4, 16, 16, 4

    key = jax.random.PRNGKey(0)
    kx, kw, kb = jax.random.split(key, 3)

    x = jax.random.normal(kx, (B, C, H, W), dtype=jnp.float32)

    # Conv2d(C, C, P, stride=P) parameters, PyTorch-style uniform init.
    fan_in = C * P * P
    bound = 1.0 / (fan_in ** 0.5)
    weight = jax.random.uniform(kw, (C, C, P, P), jnp.float32, -bound, bound)
    bias = jax.random.uniform(kb, (C,), jnp.float32, -bound, bound)

    def _run(conservative):
        fwd = jax.jit(functools.partial(patch_embeddings, patch_size=P,
                                        conservative=conservative))
        return jax.block_until_ready(fwd(x, weight, bias))

    try:
        out = _run(False)
    except Exception:
        # Fallback if this jax build rejects pl.Buffered(1) / the precision attr.
        out = _run(True)

    # Sanity check against XLA's conv (same semantics as torch Conv2d).
    ref = lax.conv_general_dilated(
        x, weight, window_strides=(P, P), padding="VALID",
        dimension_numbers=("NCHW", "OIHW", "NCHW"),
    ) + bias.reshape(1, C, 1, 1)

    assert out.shape == (B, C, H // P, W // P)
    assert jnp.allclose(out, ref, atol=3e-5, rtol=3e-5), \
        float(jnp.max(jnp.abs(out - ref)))

    print("KERNEL_OK")
</pallas_src>

<mosaic_0001>
module attributes {stable_mosaic.version = 11 : i64} {
  func.func @_patch_embed_kernel(%arg0: i32, %arg1: i32, %arg2: memref<1x64x16xf32, #tpu.memory_space<vmem>>, %arg3: memref<4x64xf32, #tpu.memory_space<vmem>>, %arg4: memref<4x1xf32, #tpu.memory_space<vmem>>, %arg5: memref<1x4x16xf32, #tpu.memory_space<vmem>>) attributes {dimension_semantics = [#tpu.dimension_semantics<parallel>, #tpu.dimension_semantics<parallel>], iteration_bounds = array<i64: 2, 1>, scalar_prefetch = 0 : i64, scratch_operands = 0 : i64, tpu.core_type = #tpu.core_type<tc>, window_params = [{transform_indices = @transform_0, window_bounds = array<i64: 1, 64, 16>}, {pipeline_mode = #tpu.pipeline_mode<synchronous>, transform_indices = @transform_1, window_bounds = array<i64: 4, 64>}, {pipeline_mode = #tpu.pipeline_mode<synchronous>, transform_indices = @transform_2, window_bounds = array<i64: 4, 1>}, {transform_indices = @transform_3, window_bounds = array<i64: 1, 4, 16>}]} {
    %c0 = arith.constant 0 : index
    %c0_0 = arith.constant 0 : index
    %0 = vector.load %arg3[%c0, %c0_0] : memref<4x64xf32, #tpu.memory_space<vmem>>, vector<4x64xf32>
    %c0_1 = arith.constant 0 : index
    %c0_2 = arith.constant 0 : index
    %c0_3 = arith.constant 0 : index
    %1 = vector.load %arg2[%c0_1, %c0_2, %c0_3] : memref<1x64x16xf32, #tpu.memory_space<vmem>>, vector<1x64x16xf32>
    %2 = vector.shape_cast %1 : vector<1x64x16xf32> to vector<64x16xf32>
    %cst = arith.constant dense<0.000000e+00> : vector<4x16xf32>
    %3 = tpu.matmul %0, %2, %cst {dimension_numbers = #tpu.dot_dimension_numbers<[1], [0], [0], [1], [0, 0, 1, 1], [], []>, precision = #tpu.contract_precision<fp32>} : vector<4x64xf32>, vector<64x16xf32>, vector<4x16xf32> -> vector<4x16xf32>
    %c0_4 = arith.constant 0 : index
    %c0_5 = arith.constant 0 : index
    %4 = vector.load %arg4[%c0_4, %c0_5] : memref<4x1xf32, #tpu.memory_space<vmem>>, vector<4x1xf32>
    %5 = vector.broadcast %4 : vector<4x1xf32> to vector<4x16xf32>
    %6 = arith.addf %3, %5 : vector<4x16xf32>
    %c0_6 = arith.constant 0 : index
    %c0_7 = arith.constant 0 : index
    %c0_8 = arith.constant 0 : index
    %7 = vector.load %arg5[%c0_6, %c0_7, %c0_8] : memref<1x4x16xf32, #tpu.memory_space<vmem>>, vector<1x4x16xf32>
    %8 = vector.shape_cast %7 : vector<1x4x16xf32> to vector<4x16xf32>
    %9 = vector.shape_cast %6 : vector<4x16xf32> to vector<1x4x16xf32>
    tpu.vector_store %arg5[%c0_6, %c0_7, %c0_8], %9 {strides = array<i32>} : memref<1x4x16xf32, #tpu.memory_space<vmem>>, vector<1x4x16xf32>,
    return
  }
  func.func @transform_0(%arg0: i32, %arg1: i32) -> (i32, i32, i32) {
    %c0_i32 = arith.constant 0 : i32
    %c0_i32_0 = arith.constant 0 : i32
    return %arg0, %c0_i32, %arg1 : i32, i32, i32
  }
  func.func @transform_1(%arg0: i32, %arg1: i32) -> (i32, i32) {
    %c0_i32 = arith.constant 0 : i32
    %c0_i32_0 = arith.constant 0 : i32
    %c0_i32_1 = arith.constant 0 : i32
    return %c0_i32, %c0_i32_0 : i32, i32
  }
  func.func @transform_2(%arg0: i32, %arg1: i32) -> (i32, i32) {
    %c0_i32 = arith.constant 0 : i32
    %c0_i32_0 = arith.constant 0 : i32
    %c0_i32_1 = arith.constant 0 : i32
    return %c0_i32, %c0_i32_0 : i32, i32
  }
  func.func @transform_3(%arg0: i32, %arg1: i32) -> (i32, i32, i32) {
    %c0_i32 = arith.constant 0 : i32
    %c0_i32_0 = arith.constant 0 : i32
    return %arg0, %c0_i32, %arg1 : i32, i32, i32
  }
}

module attributes {stable_mosaic.version = 11 : i64} {
  func.func @_patch_embed_kernel(%arg0: i32, %arg1: i32, %arg2: memref<1x64x16xf32, #tpu.memory_space<vmem>>, %arg3: memref<4x64xf32, #tpu.memory_space<vmem>>, %arg4: memref<4x1xf32, #tpu.memory_space<vmem>>, %arg5: memref<1x4x16xf32, #tpu.memory_space<vmem>>) attributes {dimension_semantics = [#tpu.dimension_semantics<parallel>, #tpu.dimension_semantics<parallel>], iteration_bounds = array<i64: 2, 1>, scalar_prefetch = 0 : i64, scratch_operands = 0 : i64, tpu.core_type = #tpu.core_type<tc>, window_params = [{transform_indices = @transform_0, window_bounds = array<i64: 1, 64, 16>}, {pipeline_mode = #tpu.pipeline_mode<synchronous>, transform_indices = @transform_1, window_bounds = array<i64: 4, 64>}, {pipeline_mode = #tpu.pipeline_mode<synchronous>, transform_indices = @transform_2, window_bounds = array<i64: 4, 1>}, {transform_indices = @transform_3, window_bounds = array<i64: 1, 4, 16>}]} {
    %c0 = arith.constant 0 : index
    %c0_0 = arith.constant 0 : index
    %0 = vector.load %arg3[%c0, %c0_0] : memref<4x64xf32, #tpu.memory_space<vmem>>, vector<4x64xf32>
    %c0_1 = arith.constant 0 : index
    %c0_2 = arith.constant 0 : index
    %c0_3 = arith.constant 0 : index
    %1 = vector.load %arg2[%c0_1, %c0_2, %c0_3] : memref<1x64x16xf32, #tpu.memory_space<vmem>>, vector<1x64x16xf32>
    %2 = vector.shape_cast %1 : vector<1x64x16xf32> to vector<64x16xf32>
    %cst = arith.constant dense<0.000000e+00> : vector<4x16xf32>
    %3 = tpu.matmul %0, %2, %cst {dimension_numbers = #tpu.dot_dimension_numbers<[1], [0], [0], [1], [0, 0, 1, 1], [], []>} : vector<4x64xf32>, vector<64x16xf32>, vector<4x16xf32> -> vector<4x16xf32>
    %c0_4 = arith.constant 0 : index
    %c0_5 = arith.constant 0 : index
    %4 = vector.load %arg4[%c0_4, %c0_5] : memref<4x1xf32, #tpu.memory_space<vmem>>, vector<4x1xf32>
    %5 = vector.broadcast %4 : vector<4x1xf32> to vector<4x16xf32>
    %6 = arith.addf %3, %5 : vector<4x16xf32>
    %c0_6 = arith.constant 0 : index
    %c0_7 = arith.constant 0 : index
    %c0_8 = arith.constant 0 : index
    %7 = vector.load %arg5[%c0_6, %c0_7, %c0_8] : memref<1x4x16xf32, #tpu.memory_space<vmem>>, vector<1x4x16xf32>
    %8 = vector.shape_cast %7 : vector<1x4x16xf32> to vector<4x16xf32>
    %9 = vector.shape_cast %6 : vector<4x16xf32> to vector<1x4x16xf32>
    tpu.vector_store %arg5[%c0_6, %c0_7, %c0_8], %9 {strides = array<i32>} : memref<1x4x16xf32, #tpu.memory_space<vmem>>, vector<1x4x16xf32>,
    return
  }
  func.func @transform_0(%arg0: i32, %arg1: i32) -> (i32, i32, i32) {
    %c0_i32 = arith.constant 0 : i32
    %c0_i32_0 = arith.constant 0 : i32
    return %arg0, %c0_i32, %arg1 : i32, i32, i32
  }
  func.func @transform_1(%arg0: i32, %arg1: i32) -> (i32, i32) {
    %c0_i32 = arith.constant 0 : i32
    %c0_i32_0 = arith.constant 0 : i32
    %c0_i32_1 = arith.constant 0 : i32
    return %c0_i32, %c0_i32_0 : i32, i32
  }
  func.func @transform_2(%arg0: i32, %arg1: i32) -> (i32, i32) {
    %c0_i32 = arith.constant 0 : i32
    %c0_i32_0 = arith.constant 0 : i32
    %c0_i32_1 = arith.constant 0 : i32
    return %c0_i32, %c0_i32_0 : i32, i32
  }
  func.func @transform_3(%arg0: i32, %arg1: i32) -> (i32, i32, i32) {
    %c0_i32 = arith.constant 0 : i32
    %c0_i32_0 = arith.constant 0 : i32
    return %arg0, %c0_i32, %arg1 : i32, i32, i32
  }
}

</mosaic_0001>

<llo_original>
// kernel: patch_embeddings.1
$region0: #{patch_embeddings.1}
  #allocation0 [shape = 'u32[]', space=smem, size = 0x4, offset = 0x4, fixed_abs, tag = 'smem constant byte address 0x4 - core index']
  #allocation1 [shape = 'u32[144,128]{1,0:T(1,128)}', space=vmem, size = 0x12000, scoped, tag = 'internal scratch']
  %s0 = inlined_call_operand.vmem [shape: f32[2,64,16], index: 0, kind: input, shape index: {}]
  %s1 = inlined_call_operand.vmem [shape: f32[4,64], index: 1, kind: input, shape index: {}]
  %s2 = inlined_call_operand.vmem [shape: f32[4,1], index: 2, kind: input, shape index: {}]
  %s3 = inlined_call_operand.vmem [shape: f32[2,4,16], index: 3, kind: output, shape index: {}]
  %s4 = sld [smem:[#allocation0]]
  $region45: #{patch_embeddings.1} parent=0
    _
  %s6 = ssub.s32 1, %s4
  %s7 = scalar_select 0, %s6, %s4
  loop: start=0, step=1, limit=4
  $region2: #{patch_embeddings.1} parent=0 // loop_pre_header
    _
  $region3: #{patch_embeddings.1} parent=0 // loop_header
    %s9 = sphi 0, %s13
    %p10 = scmp.ge.s32.totalorder %s9, 4
    %s16 = sphi 0, %s28
    %s17 = sphi 0, %s24
    %s18 = sphi 0, %s16
    %s19 = sphi 0, %s17
    %s20 = sphi 0, %s18
    %s21 = sphi 0, %s19
    %s33 = sphi 0, %s35
    %s36 = sphi 0, %s33
    %s37 = sphi 0, %s36
    %s53 = sphi 0, %s37
    %s57 = sphi 0, %s57
    %s59 = sphi 0, %s57
    %s60 = sphi 0, %s59
    %s74 = sphi 0, %s60
    %s78 = sphi 0, %s78
    %s80 = sphi 0, %s78
    %s81 = sphi 0, %s80
    %s95 = sphi 0, %s81
    %s103 = sphi 0, %s105
    %s106 = sphi 0, %s103
    %s107 = sphi 0, %s106
    %s123 = sphi 0, %s107
  $region4: #{patch_embeddings.1} parent=0 // loop_header_branch
    %12 = sbr.rel (%p10) target = $region8
  $region5: #{patch_embeddings.1} parent=0 // loop_body
    %s14 = ssub.s32 %s9, 1
    %s15 = ssub.s32 %s9, 2
    %s22 = sadd.s32 1, %s17
    %p23 = scmp.ge.s32.totalorder %s22, 1
    %s24 = scalar_select %p23, 0, %s22
    %s25 = sadd.s32 1, %s16
    %s26 = scalar_select %p23, %s25, %s16
    %p27 = scmp.ge.s32.totalorder %s26, 2
    %s28 = scalar_select %p27, 0, %s26
    %s29 = ssub.s32 %s16, %s28
    %s30 = ssub.s32 %s17, %s24
    %s31 = sor.u32 %s29, %s30
    %p32 = scmp.eq.s32.totalorder %s31, 0
    %s34 = sadd.s32 %s33, 1
    %s35 = scalar_select %p32, %s33, %s34
    %p38 = pneg %p32
    %p39 = scmp.eq.s32.totalorder %s9, 1
    %p40 = por %p38, %p39
    %p41 = scmp.ne.s32.totalorder %s33, %s36
    %p42 = scmp.eq.s32.totalorder %s9, 0
    %p43 = por %p41, %p42
    %p44 = scmp.ne.s32.totalorder %s33, %s36
    %p45 = scmp.eq.s32.totalorder %s14, 1
    %p46 = por %p44, %p45
    %p47 = scmp.ne.s32.totalorder %s36, %s37
    %p48 = scmp.eq.s32.totalorder %s14, 0
    %p49 = por %p47, %p48
    %p50 = scmp.ne.s32.totalorder %s36, %s37
    %p51 = scmp.eq.s32.totalorder %s15, 1
    %p52 = por %p50, %p51
    %p54 = scmp.ne.s32.totalorder %s37, %s53
    %p55 = scmp.eq.s32.totalorder %s15, 0
    %p56 = por %p54, %p55
    %s58 = sadd.s32 %s57, 1
    %p61 = scmp.eq.s32.totalorder %s9, 1
    %p62 = scmp.ne.s32.totalorder %s57, %s59
    %p63 = scmp.eq.s32.totalorder %s9, 0
    %p64 = por %p62, %p63
    %p65 = scmp.ne.s32.totalorder %s57, %s59
    %p66 = scmp.eq.s32.totalorder %s14, 1
    %p67 = por %p65, %p66
    %p68 = scmp.ne.s32.totalorder %s59, %s60
    %p69 = scmp.eq.s32.totalorder %s14, 0
    %p70 = por %p68, %p69
    %p71 = scmp.ne.s32.totalorder %s59, %s60
    %p72 = scmp.eq.s32.totalorder %s15, 1
    %p73 = por %p71, %p72
    %p75 = scmp.ne.s32.totalorder %s60, %s74
    %p76 = scmp.eq.s32.totalorder %s15, 0
    %p77 = por %p75, %p76
    %s79 = sadd.s32 %s78, 1
    %p82 = scmp.eq.s32.totalorder %s9, 1
    %p83 = scmp.ne.s32.totalorder %s78, %s80
    %p84 = scmp.eq.s32.totalorder %s9, 0
    %p85 = por %p83, %p84
    %p86 = scmp.ne.s32.totalorder %s78, %s80
    %p87 = scmp.eq.s32.totalorder %s14, 1
    %p88 = por %p86, %p87
    %p89 = scmp.ne.s32.totalorder %s80, %s81
    %p90 = scmp.eq.s32.totalorder %s14, 0
    %p91 = por %p89, %p90
    %p92 = scmp.ne.s32.totalorder %s80, %s81
    %p93 = scmp.eq.s32.totalorder %s15, 1
    %p94 = por %p92, %p93
    %p96 = scmp.ne.s32.totalorder %s81, %s95
    %p97 = scmp.eq.s32.totalorder %s15, 0
    %p98 = por %p96, %p97
    %s99 = ssub.s32 %s16, %s28
    %s100 = ssub.s32 %s17, %s24
    %s101 = sor.u32 %s99, %s100
    %p102 = scmp.eq.s32.totalorder %s101, 0
    %s104 = sadd.s32 %s103, 1
    %s105 = scalar_select %p102, %s103, %s104
    %p108 = pneg %p102
    %p109 = scmp.eq.s32.totalorder %s9, 1
    %p110 = por %p108, %p109
    %p111 = scmp.ne.s32.totalorder %s103, %s106
    %p112 = scmp.eq.s32.totalorder %s9, 0
    %p113 = por %p111, %p112
    %p114 = scmp.ne.s32.totalorder %s103, %s106
    %p115 = scmp.eq.s32.totalorder %s14, 1
    %p116 = por %p114, %p115
    %p117 = scmp.ne.s32.totalorder %s106, %s107
    %p118 = scmp.eq.s32.totalorder %s14, 0
    %p119 = por %p117, %p118
    %p120 = scmp.ne.s32.totalorder %s106, %s107
    %p121 = scmp.eq.s32.totalorder %s15, 1
    %p122 = por %p120, %p121
    %p124 = scmp.ne.s32.totalorder %s107, %s123
    %p125 = scmp.eq.s32.totalorder %s15, 0
    %p126 = por %p124, %p125
    %p127 = scmp.le.s32.totalorder 1, %s9
    %p128 = scmp.lt.s32.totalorder %s9, 3
    %p129 = pnand %p127, %p128
    %p130 = pneg %p129
    // Predicated region
    $region9: #{patch_embeddings.1} parent=5 // pred_check
      _
    $region10: #{patch_embeddings.1} parent=5 // pred_check_branch
      %132 = sbr.rel (%p129) target = $region12
    $region11: #{patch_embeddings.1} parent=5 // pred_region
      %s133 = ssub.s32 %s9, 1
      // Predicated region
      $region13: #{patch_embeddings.1} parent=11 // pred_check
        %p134 = pneg %p70
      $region14: #{patch_embeddings.1} parent=11 // pred_check_branch
        %136 = sbr.rel (%p134) target = $region16
      $region15: #{patch_embeddings.1} parent=11 // pred_region
        _
      $region16: #{patch_embeddings.1} parent=11 // pred_fallthru
        _
      // Predicated region
      $region17: #{patch_embeddings.1} parent=11 // pred_check
        %p137 = pneg %p91
      $region18: #{patch_embeddings.1} parent=11 // pred_check_branch
        %139 = sbr.rel (%p137) target = $region20
      $region19: #{patch_embeddings.1} parent=11 // pred_region
        _
      $region20: #{patch_embeddings.1} parent=11 // pred_fallthru
        _
    $region12: #{patch_embeddings.1} parent=5 // pred_fallthru
      _
    %p140 = scmp.lt.s32.totalorder %s9, 2
    // Predicated region
    $region21: #{patch_embeddings.1} parent=5 // pred_check
      %p141 = pneg %p140
    $region22: #{patch_embeddings.1} parent=5 // pred_check_branch
      %143 = sbr.rel (%p141) target = $region24
    $region23: #{patch_embeddings.1} parent=5 // pred_region
      // Predicated region
      $region25: #{patch_embeddings.1} parent=23 // pred_check
        %p144 = pneg %p43
      $region26: #{patch_embeddings.1} parent=23 // pred_check_branch
        %146 = sbr.rel (%p144) target = $region28
      $region27: #{patch_embeddings.1} parent=23 // pred_region
        %p147 = scmp.lt.s32.totalorder %s16, 1
        %s148 = scalar_select %p147, %s16, 1
        %p149 = scmp.lt.s32.totalorder %s17, 0
        %s150 = scalar_select %p149, %s17, 0
        %s151 = smul.addr %s148, 8
        %s152 = sadd.s32 %s150, %s151
        %s153 = smul.addr %s152, 8
        %s154 = scalar_lea.vmem %s0, %s153
      $region28: #{patch_embeddings.1} parent=23 // pred_fallthru
        _
    $region24: #{patch_embeddings.1} parent=5 // pred_fallthru
      _
    %p155 = scmp.le.s32.totalorder 1, %s9
    %p156 = scmp.lt.s32.totalorder %s9, 3
    %p157 = pnand %p155, %p156
    %p158 = pneg %p157
    // Predicated region
    $region29: #{patch_embeddings.1} parent=5 // pred_check
      _
    $region30: #{patch_embeddings.1} parent=5 // pred_check_branch
      %160 = sbr.rel (%p157) target = $region32
    $region31: #{patch_embeddings.1} parent=5 // pred_region
      %s161 = ssub.s32 %s9, 1
      %p162 = scmp.lt.s32.totalorder %s18, 1
      %s163 = scalar_select %p162, %s18, 1
      %p164 = scmp.lt.s32.totalorder %s19, 0
      %s165 = scalar_select %p164, %s19, 0
      %s166 = smul.addr %s163, 8
      %s167 = sadd.s32 %s165, %s166
      %s168 = smul.addr %s167, 8
      %s169 = scalar_lea.vmem %s0, %s168
      %p170 = pneg %p49
      %p171 = pneg %p46
      %p172 = pneg %p70
      %p173 = pneg %p67
      %p174 = pneg %p91
      %p175 = pneg %p88
      %p176 = pneg %p119
      %p177 = pneg %p116
      %p178 = scmp.lt.s32.totalorder %s18, 1
      %s179 = scalar_select %p178, %s18, 1
      %p180 = scmp.lt.s32.totalorder %s19, 0
      %s181 = scalar_select %p180, %s19, 0
      %s182 = sadd.s32 %s181, %s179
      %s183 = smul.addr %s182, 4
      %s184 = scalar_lea.vmem %s3, %s183
      %p185 = scmp.lt.s32.totalorder %s18, 1
      %s186 = scalar_select %p185, %s18, 1
      %p187 = scmp.lt.s32.totalorder %s19, 0
      %s188 = scalar_select %p187, %s19, 0
      %s189 = smul.addr %s186, 8
      %s190 = sadd.s32 %s188, %s189
      %s191 = smul.addr %s190, 8
      %s192 = scalar_lea.vmem %s0, %s191
      %p193 = scmp.lt.s32.totalorder %s18, 1
      %s194 = scalar_select %p193, %s18, 1
      %p195 = scmp.lt.s32.totalorder %s19, 0
      %s196 = scalar_select %p195, %s19, 0
      %s197 = sadd.s32 %s196, %s194
      %s198 = smul.addr %s197, 4
      %s199 = scalar_lea.vmem %s3, %s198
      %v200 = vld [vmem:[%s1] sm:$0xf]
      %v201 = vld [vmem:[%s192] sm:$0xff]
      %v202 = vld [vmem:[%s192 + $0x8] sm:$0xff]
      %v203 = vld [vmem:[%s192 + $0x10] sm:$0xff]
      %v204 = vld [vmem:[%s192 + $0x18] sm:$0xff]
      %v205 = vld [vmem:[%s192 + $0x20] sm:$0xff]
      %v206 = vld [vmem:[%s192 + $0x28] sm:$0xff]
      %v207 = vld [vmem:[%s192 + $0x30] sm:$0xff]
      %v208 = vld [vmem:[%s192 + $0x38] sm:$0xff]
      %v209 = vld [vmem:[%s2] sm:$0xf]
      %211 = vset.pattern.permute.xlu0 0
      %212 = vperm.xlu0 %211, %v209
      %v213 = vpop.permute.xlu0 %212
      %vm215 = vcmask 523264
      %v217 = vsel %vm215, %v200, 0
      %219 = vmatprep.subr.mxu0 0.0
      %220 = vmatpush1.msra.mxu0 0.0
      %221 = vmatprep.subr.mxu0 0.0
      %222 = vmatpush1.msra.mxu0 0.0
      %223 = vmatprep.subr.mxu0 0.0
      %224 = vmatpush1.msra.mxu0 0.0
      %225 = vmatprep.subr.mxu0 0.0
      %226 = vmatpush1.msra.mxu0 0.0
      %227 = vmatprep.subr.mxu0 0.0
      %228 = vmatpush1.msra.mxu0 0.0
      %229 = vmatprep.subr.mxu0 0.0
      %230 = vmatpush1.msra.mxu0 0.0
      %231 = vmatprep.subr.mxu0 0.0
      %232 = vmatpush1.msra.mxu0 0.0
      %233 = vmatprep.subr.mxu0 0.0
      %234 = vmatpush1.msra.mxu0 0.0
      %235 = vmatprep.subr.mxu0 0.0
      %v236 = vand.u32 %v208, 4294901760
      %237 = vmatpush1.msra.mxu0 %v236
      %238 = vmatprep.subr.mxu0 0.0
      %v239 = vand.u32 %v207, 4294901760
      %240 = vmatpush1.msra.mxu0 %v239
      %241 = vmatprep.subr.mxu0 0.0
      %v242 = vand.u32 %v206, 4294901760
      %243 = vmatpush1.msra.mxu0 %v242
      %244 = vmatprep.subr.mxu0 0.0
      %v245 = vand.u32 %v205, 4294901760
      %246 = vmatpush1.msra.mxu0 %v245
      %247 = vmatprep.subr.mxu0 0.0
      %v248 = vand.u32 %v204, 4294901760
      %249 = vmatpush1.msra.mxu0 %v248
      %250 = vmatprep.subr.mxu0 0.0
      %v251 = vand.u32 %v203, 4294901760
      %252 = vmatpush1.msra.mxu0 %v251
      %253 = vmatprep.subr.mxu0 0.0
      %v254 = vand.u32 %v202, 4294901760
      %255 = vmatpush1.msra.mxu0 %v254
      %256 = vmatprep.subr.mxu0 0.0
      %v257 = vand.u32 %v201, 4294901760
      %258 = vmatpush1.msra.mxu0 %v257
      %259 = vmatprep.subr.mxu0 0.0
      %260 = vmatpush2.msra.mxu0 0.0
      %261 = vmatprep.subr.mxu0 0.0
      %262 = vmatpush2.msra.mxu0 0.0
      %263 = vmatprep.subr.mxu0 0.0
      %264 = vmatpush2.msra.mxu0 0.0
      %265 = vmatprep.subr.mxu0 0.0
      %266 = vmatpush2.msra.mxu0 0.0
      %267 = vmatprep.subr.mxu0 0.0
      %268 = vmatpush2.msra.mxu0 0.0
      %269 = vmatprep.subr.mxu0 0.0
      %270 = vmatpush2.msra.mxu0 0.0
      %271 = vmatprep.subr.mxu0 0.0
      %272 = vmatpush2.msra.mxu0 0.0
      %273 = vmatprep.subr.mxu0 0.0
      %274 = vmatpush2.msra.mxu0 0.0
      %275 = vmatprep.subr.mxu0 0.0
      %276 = vmatpush2.msra.mxu0 0.0
      %277 = vmatprep.subr.mxu0 0.0
      %278 = vmatpush2.msra.mxu0 0.0
      %279 = vmatprep.subr.mxu0 0.0
      %280 = vmatpush2.msra.mxu0 0.0
      %281 = vmatprep.subr.mxu0 0.0
      %282 = vmatpush2.msra.mxu0 0.0
      %283 = vmatprep.subr.mxu0 0.0
      %284 = vmatpush2.msra.mxu0 0.0
      %285 = vmatprep.subr.mxu0 0.0
      %286 = vmatpush2.msra.mxu0 0.0
      %287 = vmatprep.subr.mxu0 0.0
      %288 = vmatpush2.msra.mxu0 0.0
      %289 = vmatprep.subr.mxu0 0.0
      %290 = vmatpush2.msra.mxu0 0.0
      %291 = vmatprep.mubr.f32.mxu0 0.0
      %v292 = vand.u32 %v217, 4294901760
      %v293 = vsub.f32 %v217, %v292
      %v294 = vand.u32 %v293, 4294901760
      %v295 = vsub.f32 %v293, %v294
      %v296 = vand.u32 %v295, 4294901760
      %297 = vmatmul.mubr.f32.gmra.mxu0 %v296
      %v298 = vpop.f32.mrf.mxu0
      %v299 = vadd.f32 %v213, %v298
      %v300 = vpop.f32.mrf.mxu0
      %301 = vdwg.mxu0
      %302 = vmatprep.subr.mxu0 0.0
      %303 = vmatpush1.msra.mxu0 0.0
      %304 = vmatprep.subr.mxu0 0.0
      %305 = vmatpush1.msra.mxu0 0.0
      %306 = vmatprep.subr.mxu0 0.0
      %307 = vmatpush1.msra.mxu0 0.0
      %308 = vmatprep.subr.mxu0 0.0
      %309 = vmatpush1.msra.mxu0 0.0
      %310 = vmatprep.subr.mxu0 0.0
      %311 = vmatpush1.msra.mxu0 0.0
      %312 = vmatprep.subr.mxu0 0.0
      %313 = vmatpush1.msra.mxu0 0.0
      %314 = vmatprep.subr.mxu0 0.0
      %315 = vmatpush1.msra.mxu0 0.0
      %316 = vmatprep.subr.mxu0 0.0
      %317 = vmatpush1.msra.mxu0 0.0
      %318 = vmatprep.subr.mxu0 0.0
      %v319 = vand.u32 %v208, 4294901760
      %v320 = vsub.f32 %v208, %v319
      %v321 = vand.u32 %v320, 4294901760
      %v322 = vsub.f32 %v320, %v321
      %v323 = vand.u32 %v322, 4294901760
      %324 = vmatpush1.msra.mxu0 %v323
      %325 = vmatprep.subr.mxu0 0.0
      %v326 = vand.u32 %v207, 4294901760
      %v327 = vsub.f32 %v207, %v326
      %v328 = vand.u32 %v327, 4294901760
      %v329 = vsub.f32 %v327, %v328
      %v330 = vand.u32 %v329, 4294901760
      %331 = vmatpush1.msra.mxu0 %v330
      %332 = vmatprep.subr.mxu0 0.0
      %v333 = vand.u32 %v206, 4294901760
      %v334 = vsub.f32 %v206, %v333
      %v335 = vand.u32 %v334, 4294901760
      %v336 = vsub.f32 %v334, %v335
      %v337 = vand.u32 %v336, 4294901760
      %338 = vmatpush1.msra.mxu0 %v337
      %339 = vmatprep.subr.mxu0 0.0
      %v340 = vand.u32 %v205, 4294901760
      %v341 = vsub.f32 %v205, %v340
      %v342 = vand.u32 %v341, 4294901760
      %v343 = vsub.f32 %v341, %v342
      %v344 = vand.u32 %v343, 4294901760
      %345 = vmatpush1.msra.mxu0 %v344
      %346 = vmatprep.subr.mxu0 0.0
      %v347 = vand.u32 %v204, 4294901760
      %v348 = vsub.f32 %v204, %v347
      %v349 = vand.u32 %v348, 4294901760
      %v350 = vsub.f32 %v348, %v349
      %v351 = vand.u32 %v350, 4294901760
      %352 = vmatpush1.msra.mxu0 %v351
      %353 = vmatprep.subr.mxu0 0.0
      %v354 = vand.u32 %v203, 4294901760
      %v355 = vsub.f32 %v203, %v354
      %v356 = vand.u32 %v355, 4294901760
      %v357 = vsub.f32 %v355, %v356
      %v358 = vand.u32 %v357, 4294901760
      %359 = vmatpush1.msra.mxu0 %v358
      %360 = vmatprep.subr.mxu0 0.0
      %v361 = vand.u32 %v202, 4294901760
      %v362 = vsub.f32 %v202, %v361
      %v363 = vand.u32 %v362, 4294901760
      %v364 = vsub.f32 %v362, %v363
      %v365 = vand.u32 %v364, 4294901760
      %366 = vmatpush1.msra.mxu0 %v365
      %367 = vmatprep.subr.mxu0 0.0
      %v368 = vand.u32 %v201, 4294901760
      %v369 = vsub.f32 %v201, %v368
      %v370 = vand.u32 %v369, 4294901760
      %v371 = vsub.f32 %v369, %v370
      %v372 = vand.u32 %v371, 4294901760
      %373 = vmatpush1.msra.mxu0 %v372
      %374 = vmatprep.subr.mxu0 0.0
      %375 = vmatpush2.msra.mxu0 0.0
      %376 = vmatprep.subr.mxu0 0.0
      %377 = vmatpush2.msra.mxu0 0.0
      %378 = vmatprep.subr.mxu0 0.0
      %379 = vmatpush2.msra.mxu0 0.0
      %380 = vmatprep.subr.mxu0 0.0
      %381 = vmatpush2.msra.mxu0 0.0
      %382 = vmatprep.subr.mxu0 0.0
      %383 = vmatpush2.msra.mxu0 0.0
      %384 = vmatprep.subr.mxu0 0.0
      %385 = vmatpush2.msra.mxu0 0.0
      %386 = vmatprep.subr.mxu0 0.0
      %387 = vmatpush2.msra.mxu0 0.0
      %388 = vmatprep.subr.mxu0 0.0
      %389 = vmatpush2.msra.mxu0 0.0
      %390 = vmatprep.subr.mxu0 0.0
      %391 = vmatpush2.msra.mxu0 0.0
      %392 = vmatprep.subr.mxu0 0.0
      %393 = vmatpush2.msra.mxu0 0.0
      %394 = vmatprep.subr.mxu0 0.0
      %395 = vmatpush2.msra.mxu0 0.0
      %396 = vmatprep.subr.mxu0 0.0
      %397 = vmatpush2.msra.mxu0 0.0
      %398 = vmatprep.subr.mxu0 0.0
      %399 = vmatpush2.msra.mxu0 0.0
      %400 = vmatprep.subr.mxu0 0.0
      %401 = vmatpush2.msra.mxu0 0.0
      %402 = vmatprep.subr.mxu0 0.0
      %403 = vmatpush2.msra.mxu0 0.0
      %404 = vmatprep.subr.mxu0 0.0
      %405 = vmatpush2.msra.mxu0 0.0
      %406 = vmatprep.mubr.f32.mxu0 0.0
      %v407 = vand.u32 %v217, 4294901760
      %408 = vmatmul.mubr.f32.gmra.mxu0 %v407
      %v409 = vpop.f32.mrf.mxu0
      %v410 = vadd.f32 %v299, %v409
      %v411 = vpop.f32.mrf.mxu0
      %412 = vdwg.mxu0
      %413 = vmatprep.subr.mxu0 0.0
      %414 = vmatpush1.msra.mxu0 0.0
      %415 = vmatprep.subr.mxu0 0.0
      %416 = vmatpush1.msra.mxu0 0.0
      %417 = vmatprep.subr.mxu0 0.0
      %418 = vmatpush1.msra.mxu0 0.0
      %419 = vmatprep.subr.mxu0 0.0
      %420 = vmatpush1.msra.mxu0 0.0
      %421 = vmatprep.subr.mxu0 0.0
      %422 = vmatpush1.msra.mxu0 0.0
      %423 = vmatprep.subr.mxu0 0.0
      %424 = vmatpush1.msra.mxu0 0.0
      %425 = vmatprep.subr.mxu0 0.0
      %426 = vmatpush1.msra.mxu0 0.0
      %427 = vmatprep.subr.mxu0 0.0
      %428 = vmatpush1.msra.mxu0 0.0
      %429 = vmatprep.subr.mxu0 0.0
      %v430 = vand.u32 %v208, 4294901760
      %v431 = vsub.f32 %v208, %v430
      %432 = vmatpush1.msra.mxu0 %v431
      %433 = vmatprep.subr.mxu0 0.0
      %v434 = vand.u32 %v207, 4294901760
      %v435 = vsub.f32 %v207, %v434
      %436 = vmatpush1.msra.mxu0 %v435
      %437 = vmatprep.subr.mxu0 0.0
      %v438 = vand.u32 %v206, 4294901760
      %v439 = vsub.f32 %v206, %v438
      %440 = vmatpush1.msra.mxu0 %v439
      %441 = vmatprep.subr.mxu0 0.0
      %v442 = vand.u32 %v205, 4294901760
      %v443 = vsub.f32 %v205, %v442
      %444 = vmatpush1.msra.mxu0 %v443
      %445 = vmatprep.subr.mxu0 0.0
      %v446 = vand.u32 %v204, 4294901760
      %v447 = vsub.f32 %v204, %v446
      %448 = vmatpush1.msra.mxu0 %v447
      %449 = vmatprep.subr.mxu0 0.0
      %v450 = vand.u32 %v203, 4294901760
      %v451 = vsub.f32 %v203, %v450
      %452 = vmatpush1.msra.mxu0 %v451
      %453 = vmatprep.subr.mxu0 0.0
      %v454 = vand.u32 %v202, 4294901760
      %v455 = vsub.f32 %v202, %v454
      %456 = vmatpush1.msra.mxu0 %v455
      %457 = vmatprep.subr.mxu0 0.0
      %v458 = vand.u32 %v201, 4294901760
      %v459 = vsub.f32 %v201, %v458
      %460 = vmatpush1.msra.mxu0 %v459
      %461 = vmatprep.subr.mxu0 0.0
      %462 = vmatpush2.msra.mxu0 0.0
      %463 = vmatprep.subr.mxu0 0.0
      %464 = vmatpush2.msra.mxu0 0.0
      %465 = vmatprep.subr.mxu0 0.0
      %466 = vmatpush2.msra.mxu0 0.0
      %467 = vmatprep.subr.mxu0 0.0
      %468 = vmatpush2.msra.mxu0 0.0
      %469 = vmatprep.subr.mxu0 0.0
      %470 = vmatpush2.msra.mxu0 0.0
      %471 = vmatprep.subr.mxu0 0.0
      %472 = vmatpush2.msra.mxu0 0.0
      %473 = vmatprep.subr.mxu0 0.0
      %474 = vmatpush2.msra.mxu0 0.0
      %475 = vmatprep.subr.mxu0 0.0
      %476 = vmatpush2.msra.mxu0 0.0
      %477 = vmatprep.subr.mxu0 0.0
      %478 = vmatpush2.msra.mxu0 0.0
      %479 = vmatprep.subr.mxu0 0.0
      %480 = vmatpush2.msra.mxu0 0.0
      %481 = vmatprep.subr.mxu0 0.0
      %482 = vmatpush2.msra.mxu0 0.0
      %483 = vmatprep.subr.mxu0 0.0
      %484 = vmatpush2.msra.mxu0 0.0
      %485 = vmatprep.subr.mxu0 0.0
      %486 = vmatpush2.msra.mxu0 0.0
      %487 = vmatprep.subr.mxu0 0.0
      %488 = vmatpush2.msra.mxu0 0.0
      %489 = vmatprep.subr.mxu0 0.0
      %490 = vmatpush2.msra.mxu0 0.0
      %491 = vmatprep.subr.mxu0 0.0
      %492 = vmatpush2.msra.mxu0 0.0
      %493 = vmatprep.mubr.f32.mxu0 0.0
      %v494 = vand.u32 %v217, 4294901760
      %v495 = vsub.f32 %v217, %v494
      %496 = vmatmul.mubr.f32.gmra.mxu0 %v495
      %v497 = vpop.f32.mrf.mxu0
      %v498 = vadd.f32 %v410, %v497
      %v499 = vpop.f32.mrf.mxu0
      %500 = vdwg.mxu0
      %501 = vmatprep.subr.mxu0 0.0
      %502 = vmatpush1.msra.mxu0 0.0
      %503 = vmatprep.subr.mxu0 0.0
      %504 = vmatpush1.msra.mxu0 0.0
      %505 = vmatprep.subr.mxu0 0.0
      %506 = vmatpush1.msra.mxu0 0.0
      %507 = vmatprep.subr.mxu0 0.0
      %508 = vmatpush1.msra.mxu0 0.0
      %509 = vmatprep.subr.mxu0 0.0
      %510 = vmatpush1.msra.mxu0 0.0
      %511 = vmatprep.subr.mxu0 0.0
      %512 = vmatpush1.msra.mxu0 0.0
      %513 = vmatprep.subr.mxu0 0.0
      %514 = vmatpush1.msra.mxu0 0.0
      %515 = vmatprep.subr.mxu0 0.0
      %516 = vmatpush1.msra.mxu0 0.0
      %517 = vmatprep.subr.mxu0 0.0
      %v518 = vand.u32 %v208, 4294901760
      %519 = vmatpush1.msra.mxu0 %v518
      %520 = vmatprep.subr.mxu0 0.0
      %v521 = vand.u32 %v207, 4294901760
      %522 = vmatpush1.msra.mxu0 %v521
      %523 = vmatprep.subr.mxu0 0.0
      %v524 = vand.u32 %v206, 4294901760
      %525 = vmatpush1.msra.mxu0 %v524
      %526 = vmatprep.subr.mxu0 0.0
      %v527 = vand.u32 %v205, 4294901760
      %528 = vmatpush1.msra.mxu0 %v527
      %529 = vmatprep.subr.mxu0 0.0
      %v530 = vand.u32 %v204, 4294901760
      %531 = vmatpush1.msra.mxu0 %v530
      %532 = vmatprep.subr.mxu0 0.0
      %v533 = vand.u32 %v203, 4294901760
      %534 = vmatpush1.msra.mxu0 %v533
      %535 = vmatprep.subr.mxu0 0.0
      %v536 = vand.u32 %v202, 4294901760
      %537 = vmatpush1.msra.mxu0 %v536
      %538 = vmatprep.subr.mxu0 0.0
      %v539 = vand.u32 %v201, 4294901760
      %540 = vmatpush1.msra.mxu0 %v539
      %541 = vmatprep.subr.mxu0 0.0
      %542 = vmatpush2.msra.mxu0 0.0
      %543 = vmatprep.subr.mxu0 0.0
      %544 = vmatpush2.msra.mxu0 0.0
      %545 = vmatprep.subr.mxu0 0.0
      %546 = vmatpush2.msra.mxu0 0.0
      %547 = vmatprep.subr.mxu0 0.0
      %548 = vmatpush2.msra.mxu0 0.0
      %549 = vmatprep.subr.mxu0 0.0
      %550 = vmatpush2.msra.mxu0 0.0
      %551 = vmatprep.subr.mxu0 0.0
      %552 = vmatpush2.msra.mxu0 0.0
      %553 = vmatprep.subr.mxu0 0.0
      %554 = vmatpush2.msra.mxu0 0.0
      %555 = vmatprep.subr.mxu0 0.0
      %556 = vmatpush2.msra.mxu0 0.0
      %557 = vmatprep.subr.mxu0 0.0
      %558 = vmatpush2.msra.mxu0 0.0
      %559 = vmatprep.subr.mxu0 0.0
      %560 = vmatpush2.msra.mxu0 0.0
      %561 = vmatprep.subr.mxu0 0.0
      %562 = vmatpush2.msra.mxu0 0.0
      %563 = vmatprep.subr.mxu0 0.0
      %564 = vmatpush2.msra.mxu0 0.0
      %565 = vmatprep.subr.mxu0 0.0
      %566 = vmatpush2.msra.mxu0 0.0
      %567 = vmatprep.subr.mxu0 0.0
      %568 = vmatpush2.msra.mxu0 0.0
      %569 = vmatprep.subr.mxu0 0.0
      %570 = vmatpush2.msra.mxu0 0.0
      %571 = vmatprep.subr.mxu0 0.0
      %572 = vmatpush2.msra.mxu0 0.0
      %573 = vmatprep.mubr.f32.mxu0 0.0
      %v574 = vand.u32 %v217, 4294901760
      %v575 = vsub.f32 %v217, %v574
      %v576 = vand.u32 %v575, 4294901760
      %577 = vmatmul.mubr.f32.gmra.mxu0 %v576
      %v578 = vpop.f32.mrf.mxu0
      %v579 = vadd.f32 %v498, %v578
      %v580 = vpop.f32.mrf.mxu0
      %581 = vdwg.mxu0
      %582 = vmatprep.subr.mxu0 0.0
      %583 = vmatpush1.msra.mxu0 0.0
      %584 = vmatprep.subr.mxu0 0.0
      %585 = vmatpush1.msra.mxu0 0.0
      %586 = vmatprep.subr.mxu0 0.0
      %587 = vmatpush1.msra.mxu0 0.0
      %588 = vmatprep.subr.mxu0 0.0
      %589 = vmatpush1.msra.mxu0 0.0
      %590 = vmatprep.subr.mxu0 0.0
      %591 = vmatpush1.msra.mxu0 0.0
      %592 = vmatprep.subr.mxu0 0.0
      %593 = vmatpush1.msra.mxu0 0.0
      %594 = vmatprep.subr.mxu0 0.0
      %595 = vmatpush1.msra.mxu0 0.0
      %596 = vmatprep.subr.mxu0 0.0
      %597 = vmatpush1.msra.mxu0 0.0
      %598 = vmatprep.subr.mxu0 0.0
      %v599 = vand.u32 %v208, 4294901760
      %v600 = vsub.f32 %v208, %v599
      %v601 = vand.u32 %v600, 4294901760
      %602 = vmatpush1.msra.mxu0 %v601
      %603 = vmatprep.subr.mxu0 0.0
      %v604 = vand.u32 %v207, 4294901760
      %v605 = vsub.f32 %v207, %v604
      %v606 = vand.u32 %v605, 4294901760
      %607 = vmatpush1.msra.mxu0 %v606
      %608 = vmatprep.subr.mxu0 0.0
      %v609 = vand.u32 %v206, 4294901760
      %v610 = vsub.f32 %v206, %v609
      %v611 = vand.u32 %v610, 4294901760
      %612 = vmatpush1.msra.mxu0 %v611
      %613 = vmatprep.subr.mxu0 0.0
      %v614 = vand.u32 %v205, 4294901760
      %v615 = vsub.f32 %v205, %v614
      %v616 = vand.u32 %v615, 4294901760
      %617 = vmatpush1.msra.mxu0 %v616
      %618 = vmatprep.subr.mxu0 0.0
      %v619 = vand.u32 %v204, 4294901760
      %v620 = vsub.f32 %v204, %v619
      %v621 = vand.u32 %v620, 4294901760
      %622 = vmatpush1.msra.mxu0 %v621
      %623 = vmatprep.subr.mxu0 0.0
      %v624 = vand.u32 %v203, 4294901760
      %v625 = vsub.f32 %v203, %v624
      %v626 = vand.u32 %v625, 4294901760
      %627 = vmatpush1.msra.mxu0 %v626
      %628 = vmatprep.subr.mxu0 0.0
      %v629 = vand.u32 %v202, 4294901760
      %v630 = vsub.f32 %v202, %v629
      %v631 = vand.u32 %v630, 4294901760
      %632 = vmatpush1.msra.mxu0 %v631
      %633 = vmatprep.subr.mxu0 0.0
      %v634 = vand.u32 %v201, 4294901760
      %v635 = vsub.f32 %v201, %v634
      %v636 = vand.u32 %v635, 4294901760
      %637 = vmatpush1.msra.mxu0 %v636
      %638 = vmatprep.subr.mxu0 0.0
      %639 = vmatpush2.msra.mxu0 0.0
      %640 = vmatprep.subr.mxu0 0.0
      %641 = vmatpush2.msra.mxu0 0.0
      %642 = vmatprep.subr.mxu0 0.0
      %643 = vmatpush2.msra.mxu0 0.0
      %644 = vmatprep.subr.mxu0 0.0
      %645 = vmatpush2.msra.mxu0 0.0
      %646 = vmatprep.subr.mxu0 0.0
      %647 = vmatpush2.msra.mxu0 0.0
      %648 = vmatprep.subr.mxu0 0.0
      %649 = vmatpush2.msra.mxu0 0.0
      %650 = vmatprep.subr.mxu0 0.0
      %651 = vmatpush2.msra.mxu0 0.0
      %652 = vmatprep.subr.mxu0 0.0
      %653 = vmatpush2.msra.mxu0 0.0
      %654 = vmatprep.subr.mxu0 0.0
      %655 = vmatpush2.msra.mxu0 0.0
      %656 = vmatprep.subr.mxu0 0.0
      %657 = vmatpush2.msra.mxu0 0.0
      %658 = vmatprep.subr.mxu0 0.0
      %659 = vmatpush2.msra.mxu0 0.0
      %660 = vmatprep.subr.mxu0 0.0
      %661 = vmatpush2.msra.mxu0 0.0
      %662 = vmatprep.subr.mxu0 0.0
      %663 = vmatpush2.msra.mxu0 0.0
      %664 = vmatprep.subr.mxu0 0.0
      %665 = vmatpush2.msra.mxu0 0.0
      %666 = vmatprep.subr.mxu0 0.0
      %667 = vmatpush2.msra.mxu0 0.0
      %668 = vmatprep.subr.mxu0 0.0
      %669 = vmatpush2.msra.mxu0 0.0
      %670 = vmatprep.mubr.f32.mxu0 0.0
      %v671 = vand.u32 %v217, 4294901760
      %672 = vmatmul.mubr.f32.gmra.mxu0 %v671
      %v673 = vpop.f32.mrf.mxu0
      %v674 = vadd.f32 %v579, %v673
      %v675 = vpop.f32.mrf.mxu0
      %676 = vdwg.mxu0
      %677 = vmatprep.subr.mxu0 0.0
      %678 = vmatpush1.msra.mxu0 0.0
      %679 = vmatprep.subr.mxu0 0.0
      %680 = vmatpush1.msra.mxu0 0.0
      %681 = vmatprep.subr.mxu0 0.0
      %682 = vmatpush1.msra.mxu0 0.0
      %683 = vmatprep.subr.mxu0 0.0
      %684 = vmatpush1.msra.mxu0 0.0
      %685 = vmatprep.subr.mxu0 0.0
      %686 = vmatpush1.msra.mxu0 0.0
      %687 = vmatprep.subr.mxu0 0.0
      %688 = vmatpush1.msra.mxu0 0.0
      %689 = vmatprep.subr.mxu0 0.0
      %690 = vmatpush1.msra.mxu0 0.0
      %691 = vmatprep.subr.mxu0 0.0
      %692 = vmatpush1.msra.mxu0 0.0
      %693 = vmatprep.subr.mxu0 0.0
      %v694 = vand.u32 %v208, 4294901760
      %695 = vmatpush1.msra.mxu0 %v694
      %696 = vmatprep.subr.mxu0 0.0
      %v697 = vand.u32 %v207, 4294901760
      %698 = vmatpush1.msra.mxu0 %v697
      %699 = vmatprep.subr.mxu0 0.0
      %v700 = vand.u32 %v206, 4294901760
      %701 = vmatpush1.msra.mxu0 %v700
      %702 = vmatprep.subr.mxu0 0.0
      %v703 = vand.u32 %v205, 4294901760
      %704 = vmatpush1.msra.mxu0 %v703
      %705 = vmatprep.subr.mxu0 0.0
      %v706 = vand.u32 %v204, 4294901760
      %707 = vmatpush1.msra.mxu0 %v706
      %708 = vmatprep.subr.mxu0 0.0
      %v709 = vand.u32 %v203, 4294901760
      %710 = vmatpush1.msra.mxu0 %v709
      %711 = vmatprep.subr.mxu0 0.0
      %v712 = vand.u32 %v202, 4294901760
      %713 = vmatpush1.msra.mxu0 %v712
      %714 = vmatprep.subr.mxu0 0.0
      %v715 = vand.u32 %v201, 4294901760
      %716 = vmatpush1.msra.mxu0 %v715
      %717 = vmatprep.subr.mxu0 0.0
      %718 = vmatpush2.msra.mxu0 0.0
      %719 = vmatprep.subr.mxu0 0.0
      %720 = vmatpush2.msra.mxu0 0.0
      %721 = vmatprep.subr.mxu0 0.0
      %722 = vmatpush2.msra.mxu0 0.0
      %723 = vmatprep.subr.mxu0 0.0
      %724 = vmatpush2.msra.mxu0 0.0
      %725 = vmatprep.subr.mxu0 0.0
      %726 = vmatpush2.msra.mxu0 0.0
      %727 = vmatprep.subr.mxu0 0.0
      %728 = vmatpush2.msra.mxu0 0.0
      %729 = vmatprep.subr.mxu0 0.0
      %730 = vmatpush2.msra.mxu0 0.0
      %731 = vmatprep.subr.mxu0 0.0
      %732 = vmatpush2.msra.mxu0 0.0
      %733 = vmatprep.subr.mxu0 0.0
      %734 = vmatpush2.msra.mxu0 0.0
      %735 = vmatprep.subr.mxu0 0.0
      %736 = vmatpush2.msra.mxu0 0.0
      %737 = vmatprep.subr.mxu0 0.0
      %738 = vmatpush2.msra.mxu0 0.0
      %739 = vmatprep.subr.mxu0 0.0
      %740 = vmatpush2.msra.mxu0 0.0
      %741 = vmatprep.subr.mxu0 0.0
      %742 = vmatpush2.msra.mxu0 0.0
      %743 = vmatprep.subr.mxu0 0.0
      %744 = vmatpush2.msra.mxu0 0.0
      %745 = vmatprep.subr.mxu0 0.0
      %746 = vmatpush2.msra.mxu0 0.0
      %747 = vmatprep.subr.mxu0 0.0
      %748 = vmatpush2.msra.mxu0 0.0
      %749 = vmatprep.mubr.f32.mxu0 0.0
      %v750 = vand.u32 %v217, 4294901760
      %751 = vmatmul.mubr.f32.gmra.mxu0 %v750
      %v752 = vpop.f32.mrf.mxu0
      %v753 = vadd.f32 %v674, %v752
      %v754 = vpop.f32.mrf.mxu0
      %755 = vdwg.mxu0
      %vm756 = vcmask 125952
      %757 = vst.msk [vmem:[%s199] sm:$0xf] %vm756, %v753
      %p758 = scmp.lt.s32.totalorder %s18, 1
      %s759 = scalar_select %p758, %s18, 1
      %p760 = scmp.lt.s32.totalorder %s19, 0
      %s761 = scalar_select %p760, %s19, 0
      %s762 = sadd.s32 %s761, %s759
      %s763 = smul.addr %s762, 4
      %s764 = scalar_lea.vmem %s3, %s763
      // Predicated region
      $region33: #{patch_embeddings.1} parent=31 // pred_check
        %p765 = pneg %p116
      $region34: #{patch_embeddings.1} parent=31 // pred_check_branch
        %767 = sbr.rel (%p765) target = $region36
      $region35: #{patch_embeddings.1} parent=31 // pred_region
        _
      $region36: #{patch_embeddings.1} parent=31 // pred_fallthru
        _
    $region32: #{patch_embeddings.1} parent=5 // pred_fallthru
      _
    %p768 = scmp.le.s32.totalorder 2, %s9
    // Predicated region
    $region37: #{patch_embeddings.1} parent=5 // pred_check
      %p769 = pneg %p768
    $region38: #{patch_embeddings.1} parent=5 // pred_check_branch
      %771 = sbr.rel (%p769) target = $region40
    $region39: #{patch_embeddings.1} parent=5 // pred_region
      %s772 = ssub.s32 %s9, 2
      // Predicated region
      $region41: #{patch_embeddings.1} parent=39 // pred_check
        %p773 = pneg %p122
      $region42: #{patch_embeddings.1} parent=39 // pred_check_branch
        %775 = sbr.rel (%p773) target = $region44
      $region43: #{patch_embeddings.1} parent=39 // pred_region
        %p776 = scmp.lt.s32.totalorder %s20, 1
        %s777 = scalar_select %p776, %s20, 1
        %p778 = scmp.lt.s32.totalorder %s21, 0
        %s779 = scalar_select %p778, %s21, 0
        %s780 = sadd.s32 %s779, %s777
        %s781 = smul.addr %s780, 4
        %s782 = scalar_lea.vmem %s3, %s781
      $region44: #{patch_embeddings.1} parent=39 // pred_fallthru
        _
    $region40: #{patch_embeddings.1} parent=5 // pred_fallthru
      _
  $region6: #{patch_embeddings.1} parent=0 // loop_footer
    %s13 = sadd.s32 1, %s9
  $region7: #{patch_embeddings.1} parent=0 // loop_footer_branch
    %8 = sbr.rel target = $region3
  $region8: #{patch_embeddings.1} parent=0 // loop_exit
    _

// kernel: patch_embeddings.1
$region0: #{patch_embeddings.1}
  #allocation0 [shape = 'u32[]', space=smem, size = 0x4, offset = 0x4, fixed_abs, tag = 'smem constant byte address 0x4 - core index']
  #allocation1 [shape = 'u32[144,128]{1,0:T(1,128)}', space=vmem, size = 0x12000, scoped, tag = 'internal scratch']
  %s0 = inlined_call_operand.vmem [shape: f32[2,64,16], index: 0, kind: input, shape index: {}]
  %s1 = inlined_call_operand.vmem [shape: f32[4,64], index: 1, kind: input, shape index: {}]
  %s2 = inlined_call_operand.vmem [shape: f32[4,1], index: 2, kind: input, shape index: {}]
  %s3 = inlined_call_operand.vmem [shape: f32[2,4,16], index: 3, kind: output, shape index: {}]
  %s4 = sld [smem:[#allocation0]]
  $region45: #{patch_embeddings.1} parent=0
    _
  %s6 = ssub.s32 1, %s4
  %s7 = scalar_select 0, %s6, %s4
  loop: start=0, step=1, limit=4
  $region2: #{patch_embeddings.1} parent=0 // loop_pre_header
    _
  $region3: #{patch_embeddings.1} parent=0 // loop_header
    %s9 = sphi 0, %s13
    %p10 = scmp.ge.s32.totalorder %s9, 4
    %s16 = sphi 0, %s28
    %s17 = sphi 0, %s24
    %s18 = sphi 0, %s16
    %s19 = sphi 0, %s17
    %s20 = sphi 0, %s18
    %s21 = sphi 0, %s19
    %s33 = sphi 0, %s35
    %s36 = sphi 0, %s33
    %s37 = sphi 0, %s36
    %s53 = sphi 0, %s37
    %s57 = sphi 0, %s57
    %s59 = sphi 0, %s57
    %s60 = sphi 0, %s59
    %s74 = sphi 0, %s60
    %s78 = sphi 0, %s78
    %s80 = sphi 0, %s78
    %s81 = sphi 0, %s80
    %s95 = sphi 0, %s81
    %s103 = sphi 0, %s105
    %s106 = sphi 0, %s103
    %s107 = sphi 0, %s106
    %s123 = sphi 0, %s107
  $region4: #{patch_embeddings.1} parent=0 // loop_header_branch
    %12 = sbr.rel (%p10) target = $region8
  $region5: #{patch_embeddings.1} parent=0 // loop_body
    %s14 = ssub.s32 %s9, 1
    %s15 = ssub.s32 %s9, 2
    %s22 = sadd.s32 1, %s17
    %p23 = scmp.ge.s32.totalorder %s22, 1
    %s24 = scalar_select %p23, 0, %s22
    %s25 = sadd.s32 1, %s16
    %s26 = scalar_select %p23, %s25, %s16
    %p27 = scmp.ge.s32.totalorder %s26, 2
    %s28 = scalar_select %p27, 0, %s26
    %s29 = ssub.s32 %s16, %s28
    %s30 = ssub.s32 %s17, %s24
    %s31 = sor.u32 %s29, %s30
    %p32 = scmp.eq.s32.totalorder %s31, 0
    %s34 = sadd.s32 %s33, 1
    %s35 = scalar_select %p32, %s33, %s34
    %p38 = pneg %p32
    %p39 = scmp.eq.s32.totalorder %s9, 1
    %p40 = por %p38, %p39
    %p41 = scmp.ne.s32.totalorder %s33, %s36
    %p42 = scmp.eq.s32.totalorder %s9, 0
    %p43 = por %p41, %p42
    %p44 = scmp.ne.s32.totalorder %s33, %s36
    %p45 = scmp.eq.s32.totalorder %s14, 1
    %p46 = por %p44, %p45
    %p47 = scmp.ne.s32.totalorder %s36, %s37
    %p48 = scmp.eq.s32.totalorder %s14, 0
    %p49 = por %p47, %p48
    %p50 = scmp.ne.s32.totalorder %s36, %s37
    %p51 = scmp.eq.s32.totalorder %s15, 1
    %p52 = por %p50, %p51
    %p54 = scmp.ne.s32.totalorder %s37, %s53
    %p55 = scmp.eq.s32.totalorder %s15, 0
    %p56 = por %p54, %p55
    %s58 = sadd.s32 %s57, 1
    %p61 = scmp.eq.s32.totalorder %s9, 1
    %p62 = scmp.ne.s32.totalorder %s57, %s59
    %p63 = scmp.eq.s32.totalorder %s9, 0
    %p64 = por %p62, %p63
    %p65 = scmp.ne.s32.totalorder %s57, %s59
    %p66 = scmp.eq.s32.totalorder %s14, 1
    %p67 = por %p65, %p66
    %p68 = scmp.ne.s32.totalorder %s59, %s60
    %p69 = scmp.eq.s32.totalorder %s14, 0
    %p70 = por %p68, %p69
    %p71 = scmp.ne.s32.totalorder %s59, %s60
    %p72 = scmp.eq.s32.totalorder %s15, 1
    %p73 = por %p71, %p72
    %p75 = scmp.ne.s32.totalorder %s60, %s74
    %p76 = scmp.eq.s32.totalorder %s15, 0
    %p77 = por %p75, %p76
    %s79 = sadd.s32 %s78, 1
    %p82 = scmp.eq.s32.totalorder %s9, 1
    %p83 = scmp.ne.s32.totalorder %s78, %s80
    %p84 = scmp.eq.s32.totalorder %s9, 0
    %p85 = por %p83, %p84
    %p86 = scmp.ne.s32.totalorder %s78, %s80
    %p87 = scmp.eq.s32.totalorder %s14, 1
    %p88 = por %p86, %p87
    %p89 = scmp.ne.s32.totalorder %s80, %s81
    %p90 = scmp.eq.s32.totalorder %s14, 0
    %p91 = por %p89, %p90
    %p92 = scmp.ne.s32.totalorder %s80, %s81
    %p93 = scmp.eq.s32.totalorder %s15, 1
    %p94 = por %p92, %p93
    %p96 = scmp.ne.s32.totalorder %s81, %s95
    %p97 = scmp.eq.s32.totalorder %s15, 0
    %p98 = por %p96, %p97
    %s99 = ssub.s32 %s16, %s28
    %s100 = ssub.s32 %s17, %s24
    %s101 = sor.u32 %s99, %s100
    %p102 = scmp.eq.s32.totalorder %s101, 0
    %s104 = sadd.s32 %s103, 1
    %s105 = scalar_select %p102, %s103, %s104
    %p108 = pneg %p102
    %p109 = scmp.eq.s32.totalorder %s9, 1
    %p110 = por %p108, %p109
    %p111 = scmp.ne.s32.totalorder %s103, %s106
    %p112 = scmp.eq.s32.totalorder %s9, 0
    %p113 = por %p111, %p112
    %p114 = scmp.ne.s32.totalorder %s103, %s106
    %p115 = scmp.eq.s32.totalorder %s14, 1
    %p116 = por %p114, %p115
    %p117 = scmp.ne.s32.totalorder %s106, %s107
    %p118 = scmp.eq.s32.totalorder %s14, 0
    %p119 = por %p117, %p118
    %p120 = scmp.ne.s32.totalorder %s106, %s107
    %p121 = scmp.eq.s32.totalorder %s15, 1
    %p122 = por %p120, %p121
    %p124 = scmp.ne.s32.totalorder %s107, %s123
    %p125 = scmp.eq.s32.totalorder %s15, 0
    %p126 = por %p124, %p125
    %p127 = scmp.le.s32.totalorder 1, %s9
    %p128 = scmp.lt.s32.totalorder %s9, 3
    %p129 = pnand %p127, %p128
    %p130 = pneg %p129
    // Predicated region
    $region9: #{patch_embeddings.1} parent=5 // pred_check
      _
    $region10: #{patch_embeddings.1} parent=5 // pred_check_branch
      %132 = sbr.rel (%p129) target = $region12
    $region11: #{patch_embeddings.1} parent=5 // pred_region
      %s133 = ssub.s32 %s9, 1
      // Predicated region
      $region13: #{patch_embeddings.1} parent=11 // pred_check
        %p134 = pneg %p70
      $region14: #{patch_embeddings.1} parent=11 // pred_check_branch
        %136 = sbr.rel (%p134) target = $region16
      $region15: #{patch_embeddings.1} parent=11 // pred_region
        _
      $region16: #{patch_embeddings.1} parent=11 // pred_fallthru
        _
      // Predicated region
      $region17: #{patch_embeddings.1} parent=11 // pred_check
        %p137 = pneg %p91
      $region18: #{patch_embeddings.1} parent=11 // pred_check_branch
        %139 = sbr.rel (%p137) target = $region20
      $region19: #{patch_embeddings.1} parent=11 // pred_region
        _
      $region20: #{patch_embeddings.1} parent=11 // pred_fallthru
        _
    $region12: #{patch_embeddings.1} parent=5 // pred_fallthru
      _
    %p140 = scmp.lt.s32.totalorder %s9, 2
    // Predicated region
    $region21: #{patch_embeddings.1} parent=5 // pred_check
      %p141 = pneg %p140
    $region22: #{patch_embeddings.1} parent=5 // pred_check_branch
      %143 = sbr.rel (%p141) target = $region24
    $region23: #{patch_embeddings.1} parent=5 // pred_region
      // Predicated region
      $region25: #{patch_embeddings.1} parent=23 // pred_check
        %p144 = pneg %p43
      $region26: #{patch_embeddings.1} parent=23 // pred_check_branch
        %146 = sbr.rel (%p144) target = $region28
      $region27: #{patch_embeddings.1} parent=23 // pred_region
        %p147 = scmp.lt.s32.totalorder %s16, 1
        %s148 = scalar_select %p147, %s16, 1
        %p149 = scmp.lt.s32.totalorder %s17, 0
        %s150 = scalar_select %p149, %s17, 0
        %s151 = smul.addr %s148, 8
        %s152 = sadd.s32 %s150, %s151
        %s153 = smul.addr %s152, 8
        %s154 = scalar_lea.vmem %s0, %s153
      $region28: #{patch_embeddings.1} parent=23 // pred_fallthru
        _
    $region24: #{patch_embeddings.1} parent=5 // pred_fallthru
      _
    %p155 = scmp.le.s32.totalorder 1, %s9
    %p156 = scmp.lt.s32.totalorder %s9, 3
    %p157 = pnand %p155, %p156
    %p158 = pneg %p157
    // Predicated region
    $region29: #{patch_embeddings.1} parent=5 // pred_check
      _
    $region30: #{patch_embeddings.1} parent=5 // pred_check_branch
      %160 = sbr.rel (%p157) target = $region32
    $region31: #{patch_embeddings.1} parent=5 // pred_region
      %s161 = ssub.s32 %s9, 1
      %p162 = scmp.lt.s32.totalorder %s18, 1
      %s163 = scalar_select %p162, %s18, 1
      %p164 = scmp.lt.s32.totalorder %s19, 0
      %s165 = scalar_select %p164, %s19, 0
      %s166 = smul.addr %s163, 8
      %s167 = sadd.s32 %s165, %s166
      %s168 = smul.addr %s167, 8
      %s169 = scalar_lea.vmem %s0, %s168
      %p170 = pneg %p49
      %p171 = pneg %p46
      %p172 = pneg %p70
      %p173 = pneg %p67
      %p174 = pneg %p91
      %p175 = pneg %p88
      %p176 = pneg %p119
      %p177 = pneg %p116
      %p178 = scmp.lt.s32.totalorder %s18, 1
      %s179 = scalar_select %p178, %s18, 1
      %p180 = scmp.lt.s32.totalorder %s19, 0
      %s181 = scalar_select %p180, %s19, 0
      %s182 = sadd.s32 %s181, %s179
      %s183 = smul.addr %s182, 4
      %s184 = scalar_lea.vmem %s3, %s183
      %p185 = scmp.lt.s32.totalorder %s18, 1
      %s186 = scalar_select %p185, %s18, 1
      %p187 = scmp.lt.s32.totalorder %s19, 0
      %s188 = scalar_select %p187, %s19, 0
      %s189 = smul.addr %s186, 8
      %s190 = sadd.s32 %s188, %s189
      %s191 = smul.addr %s190, 8
      %s192 = scalar_lea.vmem %s0, %s191
      %p193 = scmp.lt.s32.totalorder %s18, 1
      %s194 = scalar_select %p193, %s18, 1
      %p195 = scmp.lt.s32.totalorder %s19, 0
      %s196 = scalar_select %p195, %s19, 0
      %s197 = sadd.s32 %s196, %s194
      %s198 = smul.addr %s197, 4
      %s199 = scalar_lea.vmem %s3, %s198
      %v200 = vld [vmem:[%s1] sm:$0xf]
      %v201 = vld [vmem:[%s192] sm:$0xff]
      %v202 = vld [vmem:[%s192 + $0x8] sm:$0xff]
      %v203 = vld [vmem:[%s192 + $0x10] sm:$0xff]
      %v204 = vld [vmem:[%s192 + $0x18] sm:$0xff]
      %v205 = vld [vmem:[%s192 + $0x20] sm:$0xff]
      %v206 = vld [vmem:[%s192 + $0x28] sm:$0xff]
      %v207 = vld [vmem:[%s192 + $0x30] sm:$0xff]
      %v208 = vld [vmem:[%s192 + $0x38] sm:$0xff]
      %v209 = vld [vmem:[%s2] sm:$0xf]
      %211 = vset.pattern.permute.xlu0 0
      %212 = vperm.xlu0 %211, %v209
      %v213 = vpop.permute.xlu0 %212
      %vm215 = vcmask 523264
      %v217 = vsel %vm215, %v200, 0
      %219 = vmatprep.subr.mxu0 0.0
      %220 = vmatpush1.msra.mxu0 0.0
      %221 = vmatprep.subr.mxu0 0.0
      %222 = vmatpush1.msra.mxu0 0.0
      %223 = vmatprep.subr.mxu0 0.0
      %224 = vmatpush1.msra.mxu0 0.0
      %225 = vmatprep.subr.mxu0 0.0
      %226 = vmatpush1.msra.mxu0 0.0
      %227 = vmatprep.subr.mxu0 0.0
      %228 = vmatpush1.msra.mxu0 0.0
      %229 = vmatprep.subr.mxu0 0.0
      %230 = vmatpush1.msra.mxu0 0.0
      %231 = vmatprep.subr.mxu0 0.0
      %232 = vmatpush1.msra.mxu0 0.0
      %233 = vmatprep.subr.mxu0 0.0
      %234 = vmatpush1.msra.mxu0 0.0
      %235 = vmatprep.subr.mxu0 0.0
      %236 = vmatpush1.msra.mxu0 %v208
      %237 = vmatprep.subr.mxu0 0.0
      %238 = vmatpush1.msra.mxu0 %v207
      %239 = vmatprep.subr.mxu0 0.0
      %240 = vmatpush1.msra.mxu0 %v206
      %241 = vmatprep.subr.mxu0 0.0
      %242 = vmatpush1.msra.mxu0 %v205
      %243 = vmatprep.subr.mxu0 0.0
      %244 = vmatpush1.msra.mxu0 %v204
      %245 = vmatprep.subr.mxu0 0.0
      %246 = vmatpush1.msra.mxu0 %v203
      %247 = vmatprep.subr.mxu0 0.0
      %248 = vmatpush1.msra.mxu0 %v202
      %249 = vmatprep.subr.mxu0 0.0
      %250 = vmatpush1.msra.mxu0 %v201
      %251 = vmatprep.subr.mxu0 0.0
      %252 = vmatpush2.msra.mxu0 0.0
      %253 = vmatprep.subr.mxu0 0.0
      %254 = vmatpush2.msra.mxu0 0.0
      %255 = vmatprep.subr.mxu0 0.0
      %256 = vmatpush2.msra.mxu0 0.0
      %257 = vmatprep.subr.mxu0 0.0
      %258 = vmatpush2.msra.mxu0 0.0
      %259 = vmatprep.subr.mxu0 0.0
      %260 = vmatpush2.msra.mxu0 0.0
      %261 = vmatprep.subr.mxu0 0.0
      %262 = vmatpush2.msra.mxu0 0.0
      %263 = vmatprep.subr.mxu0 0.0
      %264 = vmatpush2.msra.mxu0 0.0
      %265 = vmatprep.subr.mxu0 0.0
      %266 = vmatpush2.msra.mxu0 0.0
      %267 = vmatprep.subr.mxu0 0.0
      %268 = vmatpush2.msra.mxu0 0.0
      %269 = vmatprep.subr.mxu0 0.0
      %270 = vmatpush2.msra.mxu0 0.0
      %271 = vmatprep.subr.mxu0 0.0
      %272 = vmatpush2.msra.mxu0 0.0
      %273 = vmatprep.subr.mxu0 0.0
      %274 = vmatpush2.msra.mxu0 0.0
      %275 = vmatprep.subr.mxu0 0.0
      %276 = vmatpush2.msra.mxu0 0.0
      %277 = vmatprep.subr.mxu0 0.0
      %278 = vmatpush2.msra.mxu0 0.0
      %279 = vmatprep.subr.mxu0 0.0
      %280 = vmatpush2.msra.mxu0 0.0
      %281 = vmatprep.subr.mxu0 0.0
      %282 = vmatpush2.msra.mxu0 0.0
      %283 = vmatprep.mubr.f32.mxu0 0.0
      %284 = vmatmul.mubr.f32.gmra.mxu0 %v217
      %v285 = vpop.f32.mrf.mxu0
      %v286 = vadd.f32 %v213, %v285
      %v287 = vpop.f32.mrf.mxu0
      %288 = vdwg.mxu0
      %vm289 = vcmask 125952
      %290 = vst.msk [vmem:[%s199] sm:$0xf] %vm289, %v286
      %p291 = scmp.lt.s32.totalorder %s18, 1
      %s292 = scalar_select %p291, %s18, 1
      %p293 = scmp.lt.s32.totalorder %s19, 0
      %s294 = scalar_select %p293, %s19, 0
      %s295 = sadd.s32 %s294, %s292
      %s296 = smul.addr %s295, 4
      %s297 = scalar_lea.vmem %s3, %s296
      // Predicated region
      $region33: #{patch_embeddings.1} parent=31 // pred_check
        %p298 = pneg %p116
      $region34: #{patch_embeddings.1} parent=31 // pred_check_branch
        %300 = sbr.rel (%p298) target = $region36
      $region35: #{patch_embeddings.1} parent=31 // pred_region
        _
      $region36: #{patch_embeddings.1} parent=31 // pred_fallthru
        _
    $region32: #{patch_embeddings.1} parent=5 // pred_fallthru
      _
    %p301 = scmp.le.s32.totalorder 2, %s9
    // Predicated region
    $region37: #{patch_embeddings.1} parent=5 // pred_check
      %p302 = pneg %p301
    $region38: #{patch_embeddings.1} parent=5 // pred_check_branch
      %304 = sbr.rel (%p302) target = $region40
    $region39: #{patch_embeddings.1} parent=5 // pred_region
      %s305 = ssub.s32 %s9, 2
      // Predicated region
      $region41: #{patch_embeddings.1} parent=39 // pred_check
        %p306 = pneg %p122
      $region42: #{patch_embeddings.1} parent=39 // pred_check_branch
        %308 = sbr.rel (%p306) target = $region44
      $region43: #{patch_embeddings.1} parent=39 // pred_region
        %p309 = scmp.lt.s32.totalorder %s20, 1
        %s310 = scalar_select %p309, %s20, 1
        %p311 = scmp.lt.s32.totalorder %s21, 0
        %s312 = scalar_select %p311, %s21, 0
        %s313 = sadd.s32 %s312, %s310
        %s314 = smul.addr %s313, 4
        %s315 = scalar_lea.vmem %s3, %s314
      $region44: #{patch_embeddings.1} parent=39 // pred_fallthru
        _
    $region40: #{patch_embeddings.1} parent=5 // pred_fallthru
      _
  $region6: #{patch_embeddings.1} parent=0 // loop_footer
    %s13 = sadd.s32 1, %s9
  $region7: #{patch_embeddings.1} parent=0 // loop_footer_branch
    %8 = sbr.rel target = $region3
  $region8: #{patch_embeddings.1} parent=0 // loop_exit
    _

</llo_original>
